<compile_context>
chip_gen: v6e
topology: v6e:2x2x1
jax: 0.10.0
libtpu: 0.0.40
codegen_flags: <defaults>
</compile_context>

<pallas_src>
import functools

import jax
import jax.numpy as jnp
from jax.experimental import pallas as pl
from jax.experimental.pallas import tpu as pltpu

_LANE = 128
_MIB = 1024 * 1024


def _round_up(x, n):
    return ((x + n - 1) // n) * n


@functools.lru_cache(maxsize=1)
def _tpu_generation_and_vmem():
    """Returns (tpu_generation, per-core VMEM capacity bytes) with conservative fallbacks."""
    gen = None
    try:
        kind = jax.devices()[0].device_kind.lower()
        for g in (7, 6, 5, 4):
            if f"v{g}" in kind:
                gen = g
                break
    except Exception:
        pass
    vmem = None
    try:
        vmem = int(pltpu.get_tpu_info().vmem_capacity_bytes)
    except Exception:
        pass
    if vmem is None:
        # Unknown: assume the smaller 64 MiB/TC (v7x) budget so we never overflow.
        vmem = 64 * _MIB if (gen is None or gen >= 7) else 128 * _MIB
    if gen is None:
        gen = 7 if vmem <= 64 * _MIB else 6
    return gen, vmem


def _select_tiles(m, dim_p, hidden_p, itemsize, out_itemsize):
    """Generation-aware (tm, th, vmem_limit_bytes) with a VMEM feasibility check."""
    gen, vmem_cap = _tpu_generation_and_vmem()
    budget = int(vmem_cap * 0.85)  # headroom for compiler-internal scratch / spills

    if gen >= 7:          # v7x: 64 MiB/TC, very high HBM BW -> moderate tm, smaller th
        tm_target, th_target = 512, 512
    elif gen == 6:        # v6e: 128 MiB, weight DMA is the risk -> big tm, big th
        tm_target, th_target = 768, 1024
    else:                 # v5e and older: lower peak flops -> smaller tm suffices
        tm_target, th_target = 384, 1024

    tm = min(tm_target, _round_up(m, 8))
    th = min(th_target, hidden_p)

    # Megacore: make sure the parallel (token-tile) axis has >= 2 entries whenever m allows,
    # so v7x's two TensorCores both get work; harmless elsewhere.
    if m > 8 and _round_up(m, tm) // tm < 2:
        tm = _round_up(-(-m // 2), 8)

    def footprint(tm_, th_):
        x_b = 2 * tm_ * dim_p * itemsize          # x tile, double buffered
        o_b = 2 * tm_ * dim_p * out_itemsize      # out tile, double buffered
        w1_b = 2 * dim_p * th_ * itemsize         # W1 chunk, double buffered
        w2_b = 2 * th_ * dim_p * itemsize         # W2 chunk, double buffered
        bias_b = 2 * (th_ + dim_p) * itemsize
        acc_b = tm_ * dim_p * 4                   # f32 scratch accumulator
        h_b = tm_ * th_ * 4                       # f32 intermediate activation
        return x_b + o_b + w1_b + w2_b + bias_b + acc_b + h_b

    # Shrink the hidden-chunk width first, then the token tile, until it fits.
    while footprint(tm, th) > budget and th > _LANE:
        th = max(_LANE, _round_up(th // 2, _LANE))
    while footprint(tm, th) > budget and tm > 8:
        tm = max(8, _round_up(tm // 2, 8))

    vmem_limit = int(vmem_cap * 0.9)
    return tm, th, vmem_limit


def _ffn_kernel(x_ref, w1_ref, b1_ref, w2_ref, b2_ref, o_ref, acc_ref):
    # x_ref:  (tm, dim_p)   token tile
    # w1_ref: (dim_p, th)   hidden chunk of W1
    # b1_ref: (1, th)       hidden chunk of b1
    # w2_ref: (th, dim_p)   hidden chunk of W2
    # b2_ref: (1, dim_p)
    # o_ref:  (tm, dim_p)
    # acc_ref:(tm, dim_p)   f32 accumulator, resident across the hidden axis
    k = pl.program_id(1)

    # First matmul on this hidden chunk; bias + ReLU in f32.
    h = jnp.dot(x_ref[...], w1_ref[...], preferred_element_type=jnp.float32)
    h = jnp.maximum(h + b1_ref[...], 0.0)
    # Dropout(p=0.0) is the identity (and identity in eval mode regardless).
    contrib = jnp.dot(h.astype(w2_ref.dtype), w2_ref[...],
                      preferred_element_type=jnp.float32)

    @pl.when(k == 0)
    def _():
        # No separate zero pass: init the accumulator with the first chunk's contribution
        # and fold b2 in here so the epilogue is a pure cast+store.
        acc_ref[...] = contrib + b2_ref[...]

    @pl.when(k != 0)
    def _():
        acc_ref[...] += contrib

    @pl.when(k == pl.num_programs(1) - 1)
    def _():
        o_ref[...] = acc_ref[...].astype(o_ref.dtype)


def pad_ffn_params(w1, b1, w2, b2):
    """Pre-pad parameters to lane-dense multiples ONCE at init time.

    Exact: padded entries are zero and ReLU(0)=0. Using pre-padded params means feed_forward
    inserts no per-call jnp.pad ops for the weights (avoids a full HBM weight copy per call).
    """
    dim, hidden = w1.shape
    dim_p = _round_up(dim, _LANE)
    hidden_p = _round_up(hidden, _LANE)

    def pad2(a, rows, cols):
        pr, pc = rows - a.shape[0], cols - a.shape[1]
        return jnp.pad(a, ((0, pr), (0, pc))) if (pr or pc) else a

    return (pad2(w1, dim_p, hidden_p), pad2(b1, 1, hidden_p),
            pad2(w2, hidden_p, dim_p), pad2(b2, 1, dim_p))


@functools.partial(jax.jit, static_argnames=("tm", "th"))
def feed_forward(x, w1, b1, w2, b2, *, tm=None, th=None):
    """x: (..., dim) -> (..., dim), matching torch FeedForward.forward semantics."""
    orig_shape = x.shape
    dim = orig_shape[-1]

    x2d = x.reshape(-1, dim)
    m = x2d.shape[0]

    # ---- static tile / padding arithmetic (Python ints at trace time) ----
    dim_p = _round_up(max(dim, w1.shape[0]), _LANE)   # lane-dense; honors pre-padded weights
    hidden = w1.shape[1]
    hidden_p = _round_up(hidden, _LANE)

    itemsize = jnp.dtype(x.dtype).itemsize
    tm_sel, th_sel, vmem_limit = _select_tiles(m, dim_p, hidden_p, itemsize, itemsize)
    if tm is not None:
        tm_sel = max(8, min(_round_up(tm, 8), _round_up(m, 8)))
    if th is not None:
        th_sel = max(_LANE, min(_round_up(th, _LANE), hidden_p))

    m_p = _round_up(m, tm_sel)                # pad tokens to a tile multiple
    hidden_p = _round_up(hidden_p, th_sel)    # pad hidden to a chunk multiple

    def pad2(a, rows, cols):
        pr, pc = rows - a.shape[0], cols - a.shape[1]
        return jnp.pad(a, ((0, pr), (0, pc))) if (pr or pc) else a

    # Trace-time no-ops when already aligned / pre-padded via pad_ffn_params().
    x_p = pad2(x2d, m_p, dim_p)
    w1_p = pad2(w1, dim_p, hidden_p)
    b1_p = pad2(b1, 1, hidden_p)
    w2_p = pad2(w2, hidden_p, dim_p)
    b2_p = pad2(b2, 1, dim_p)

    n_token_tiles = m_p // tm_sel
    nk = hidden_p // th_sel

    # Serpentine hidden-chunk order: reverse k on odd token tiles so the last weight chunk
    # of tile i is reused as the first chunk of tile i+1 (one fewer W1+W2 DMA per tile).
    # Pure scalar arithmetic: k when i is even, nk-1-k when i is odd.
    def w_chunk_idx(i, k):
        return k + (i % 2) * (nk - 1 - 2 * k)

    cost = pl.CostEstimate(
        flops=4 * m_p * dim_p * hidden_p,
        transcendentals=0,
        bytes_accessed=itemsize * (2 * m_p * dim_p                       # x read + out write
                                   + n_token_tiles * 2 * dim_p * hidden_p  # W1+W2 re-streamed
                                   + hidden_p + dim_p),                   # biases
    )

    out = pl.pallas_call(
        _ffn_kernel,
        out_shape=jax.ShapeDtypeStruct((m_p, dim_p), x.dtype),
        grid_spec=pltpu.PrefetchScalarGridSpec(
            num_scalar_prefetch=0,
            grid=(n_token_tiles, nk),
            in_specs=[
                pl.BlockSpec((tm_sel, dim_p), lambda i, k: (i, 0)),                  # x tile
                pl.BlockSpec((dim_p, th_sel), lambda i, k: (0, w_chunk_idx(i, k))),  # W1 chunk
                pl.BlockSpec((1, th_sel), lambda i, k: (0, w_chunk_idx(i, k))),      # b1 chunk
                pl.BlockSpec((th_sel, dim_p), lambda i, k: (w_chunk_idx(i, k), 0)),  # W2 chunk
                pl.BlockSpec((1, dim_p), lambda i, k: (0, 0)),                       # b2
            ],
            out_specs=pl.BlockSpec((tm_sel, dim_p), lambda i, k: (i, 0)),
            scratch_shapes=[pltpu.VMEM((tm_sel, dim_p), jnp.float32)],
        ),
        compiler_params=pltpu.CompilerParams(
            dimension_semantics=("parallel", "arbitrary"),
            vmem_limit_bytes=vmem_limit,
        ),
        cost_estimate=cost,
    )(x_p, w1_p, b1_p, w2_p, b2_p)

    return out[:m, :dim].reshape(orig_shape)


def init_feed_forward_params(key, dim, hidden_dim, dtype=jnp.float32):
    """Deterministic init mirroring torch.nn.Linear (uniform +-1/sqrt(fan_in)).

    Weights are returned already transposed to (in_features, out_features).
    """
    k1, k2, k3, k4 = jax.random.split(key, 4)
    bound1 = 1.0 / (dim ** 0.5)
    bound2 = 1.0 / (hidden_dim ** 0.5)
    w1 = jax.random.uniform(k1, (dim, hidden_dim), dtype, -bound1, bound1)
    b1 = jax.random.uniform(k2, (1, hidden_dim), dtype, -bound1, bound1)
    w2 = jax.random.uniform(k3, (hidden_dim, dim), dtype, -bound2, bound2)
    b2 = jax.random.uniform(k4, (1, dim), dtype, -bound2, bound2)
    return w1, b1, w2, b2


if __name__ == "__main__":
    def ref_ffn(x, w1, b1, w2, b2):
        return jnp.maximum(x @ w1 + b1[0], 0.0) @ w2 + b2[0]

    # Test 1: toy shapes (dim < 128 exercises the padding path; m=16 exercises the
    # >=2-token-tile megacore split). Weights pre-padded once via pad_ffn_params.
    key = jax.random.PRNGKey(0)
    batch, seq, dim, hidden_dim = 2, 8, 32, 64
    kx, kp = jax.random.split(key)
    x = jax.random.normal(kx, (batch, seq, dim), jnp.float32)
    w1, b1, w2, b2 = init_feed_forward_params(kp, dim, hidden_dim)
    w1p, b1p, w2p, b2p = pad_ffn_params(w1, b1, w2, b2)

    y = feed_forward(x, w1p, b1p, w2p, b2p)
    jax.block_until_ready(y)
    ref = ref_ffn(x, w1, b1, w2, b2)
    assert y.shape == x.shape
    assert jnp.allclose(y, ref, atol=1e-5, rtol=1e-5)

    # Test 2: lane-dense shapes exercising the hidden-reduction axis (2 chunks via th=128),
    # i.e. the accumulator init/accumulate/epilogue path and the serpentine k order.
    batch, seq, dim, hidden_dim = 2, 8, 128, 256
    kx, kp = jax.random.split(jax.random.PRNGKey(1))
    x = jax.random.normal(kx, (batch, seq, dim), jnp.float32)
    w1, b1, w2, b2 = init_feed_forward_params(kp, dim, hidden_dim)

    y = feed_forward(x, w1, b1, w2, b2, th=128)
    jax.block_until_ready(y)
    ref = ref_ffn(x, w1, b1, w2, b2)
    assert y.shape == x.shape
    assert jnp.allclose(y, ref, atol=1e-3, rtol=1e-3)

    # Test 3: ragged token count / odd dims (masked-by-padding last tile).
    batch, seq, dim, hidden_dim = 1, 13, 40, 72
    kx, kp = jax.random.split(jax.random.PRNGKey(2))
    x = jax.random.normal(kx, (batch, seq, dim), jnp.float32)
    w1, b1, w2, b2 = init_feed_forward_params(kp, dim, hidden_dim)

    y = feed_forward(x, w1, b1, w2, b2)
    jax.block_until_ready(y)
    ref = ref_ffn(x, w1, b1, w2, b2)
    assert y.shape == x.shape
    assert jnp.allclose(y, ref, atol=1e-5, rtol=1e-5)

    print("KERNEL_OK")
</pallas_src>

<mosaic_0001>
module attributes {stable_mosaic.version = 11 : i64} {
  func.func @_ffn_kernel(%arg0: i32, %arg1: i32, %arg2: memref<8x128xf32, #tpu.memory_space<vmem>>, %arg3: memref<128x128xf32, #tpu.memory_space<vmem>>, %arg4: memref<1x128xf32, #tpu.memory_space<vmem>>, %arg5: memref<128x128xf32, #tpu.memory_space<vmem>>, %arg6: memref<1x128xf32, #tpu.memory_space<vmem>>, %arg7: memref<8x128xf32, #tpu.memory_space<vmem>>, %arg8: memref<8x128xf32, #tpu.memory_space<vmem>>) attributes {dimension_semantics = [#tpu.dimension_semantics<parallel>, #tpu.dimension_semantics<arbitrary>], iteration_bounds = array<i64: 2, 1>, scalar_prefetch = 0 : i64, scratch_operands = 1 : i64, tpu.core_type = #tpu.core_type<tc>, window_params = [{transform_indices = @transform_0, window_bounds = array<i64: 8, 128>}, {transform_indices = @transform_1, window_bounds = array<i64: 128, 128>}, {transform_indices = @transform_2, window_bounds = array<i64: 1, 128>}, {transform_indices = @transform_3, window_bounds = array<i64: 128, 128>}, {pipeline_mode = #tpu.pipeline_mode<synchronous>, transform_indices = @transform_4, window_bounds = array<i64: 1, 128>}, {transform_indices = @transform_5, window_bounds = array<i64: 8, 128>}]} {
    %c0 = arith.constant 0 : index
    %c0_0 = arith.constant 0 : index
    %0 = vector.load %arg2[%c0, %c0_0] : memref<8x128xf32, #tpu.memory_space<vmem>>, vector<8x128xf32>
    %c0_1 = arith.constant 0 : index
    %c0_2 = arith.constant 0 : index
    %1 = vector.load %arg3[%c0_1, %c0_2] : memref<128x128xf32, #tpu.memory_space<vmem>>, vector<128x128xf32>
    %cst = arith.constant dense<0.000000e+00> : vector<8x128xf32>
    %2 = tpu.matmul %0, %1, %cst {dimension_numbers = #tpu.dot_dimension_numbers<[1], [0], [0], [1], [0, 0, 1, 1], [], []>} : vector<8x128xf32>, vector<128x128xf32>, vector<8x128xf32> -> vector<8x128xf32>
    %c0_3 = arith.constant 0 : index
    %c0_4 = arith.constant 0 : index
    %3 = vector.load %arg4[%c0_3, %c0_4] : memref<1x128xf32, #tpu.memory_space<vmem>>, vector<1x128xf32>
    %4 = vector.broadcast %3 : vector<1x128xf32> to vector<8x128xf32>
    %5 = arith.addf %2, %4 : vector<8x128xf32>
    %cst_5 = arith.constant 0.000000e+00 : f32
    %6 = vector.broadcast %cst_5 : f32 to vector<8x128xf32>
    %7 = arith.maximumf %5, %6 : vector<8x128xf32>
    %c0_6 = arith.constant 0 : index
    %c0_7 = arith.constant 0 : index
    %8 = vector.load %arg5[%c0_6, %c0_7] : memref<128x128xf32, #tpu.memory_space<vmem>>, vector<128x128xf32>
    %cst_8 = arith.constant dense<0.000000e+00> : vector<8x128xf32>
    %9 = tpu.matmul %7, %8, %cst_8 {dimension_numbers = #tpu.dot_dimension_numbers<[1], [0], [0], [1], [0, 0, 1, 1], [], []>} : vector<8x128xf32>, vector<128x128xf32>, vector<8x128xf32> -> vector<8x128xf32>
    %c0_i32 = arith.constant 0 : i32
    %10 = arith.cmpi eq, %arg1, %c0_i32 : i32
    %11 = arith.extui %10 : i1 to i32
    %c0_i32_9 = arith.constant 0 : i32
    %12 = arith.cmpi ne, %11, %c0_i32_9 : i32
    scf.if %12 {
      %c0_14 = arith.constant 0 : index
      %c0_15 = arith.constant 0 : index
      %19 = vector.load %arg6[%c0_14, %c0_15] : memref<1x128xf32, #tpu.memory_space<vmem>>, vector<1x128xf32>
      %20 = vector.broadcast %19 : vector<1x128xf32> to vector<8x128xf32>
      %21 = arith.addf %9, %20 : vector<8x128xf32>
      %c0_16 = arith.constant 0 : index
      %c0_17 = arith.constant 0 : index
      %22 = vector.load %arg8[%c0_16, %c0_17] : memref<8x128xf32, #tpu.memory_space<vmem>>, vector<8x128xf32>
      tpu.vector_store %arg8[%c0_16, %c0_17], %21 {strides = array<i32>} : memref<8x128xf32, #tpu.memory_space<vmem>>, vector<8x128xf32>,
    } else {
    }
    %c0_i32_10 = arith.constant 0 : i32
    %13 = arith.cmpi ne, %arg1, %c0_i32_10 : i32
    %14 = arith.extui %13 : i1 to i32
    %c0_i32_11 = arith.constant 0 : i32
    %15 = arith.cmpi ne, %14, %c0_i32_11 : i32
    scf.if %15 {
      %c0_14 = arith.constant 0 : index
      %c0_15 = arith.constant 0 : index
      %19 = vector.load %arg8[%c0_14, %c0_15] : memref<8x128xf32, #tpu.memory_space<vmem>>, vector<8x128xf32>
      %20 = arith.addf %19, %9 : vector<8x128xf32>
      %c0_16 = arith.constant 0 : index
      %c0_17 = arith.constant 0 : index
      %21 = vector.load %arg8[%c0_16, %c0_17] : memref<8x128xf32, #tpu.memory_space<vmem>>, vector<8x128xf32>
      tpu.vector_store %arg8[%c0_16, %c0_17], %20 {strides = array<i32>} : memref<8x128xf32, #tpu.memory_space<vmem>>, vector<8x128xf32>,
    } else {
    }
    %c0_i32_12 = arith.constant 0 : i32
    %16 = arith.cmpi eq, %arg1, %c0_i32_12 : i32
    %17 = arith.extui %16 : i1 to i32
    %c0_i32_13 = arith.constant 0 : i32
    %18 = arith.cmpi ne, %17, %c0_i32_13 : i32
    scf.if %18 {
      %c0_14 = arith.constant 0 : index
      %c0_15 = arith.constant 0 : index
      %19 = vector.load %arg8[%c0_14, %c0_15] : memref<8x128xf32, #tpu.memory_space<vmem>>, vector<8x128xf32>
      %c0_16 = arith.constant 0 : index
      %c0_17 = arith.constant 0 : index
      %20 = vector.load %arg7[%c0_16, %c0_17] : memref<8x128xf32, #tpu.memory_space<vmem>>, vector<8x128xf32>
      tpu.vector_store %arg7[%c0_16, %c0_17], %19 {strides = array<i32>} : memref<8x128xf32, #tpu.memory_space<vmem>>, vector<8x128xf32>,
    } else {
    }
    return
  }
  func.func @transform_0(%arg0: i32, %arg1: i32) -> (i32, i32) {
    %c0_i32 = arith.constant 0 : i32
    %c0_i32_0 = arith.constant 0 : i32
    return %arg0, %c0_i32 : i32, i32
  }
  func.func @transform_1(%arg0: i32, %arg1: i32) -> (i32, i32) {
    %c2_i32 = arith.constant 2 : i32
    %c0_i32 = arith.constant 0 : i32
    %0 = arith.cmpi eq, %c2_i32, %c0_i32 : i32
    %c1_i32 = arith.constant 1 : i32
    %1 = arith.select %0, %c1_i32, %c2_i32 : i32
    %2 = arith.remsi %arg0, %1 : i32
    %c0_i32_0 = arith.constant 0 : i32
    %3 = arith.cmpi ne, %2, %c0_i32_0 : i32
    %c0_i32_1 = arith.constant 0 : i32
    %4 = arith.cmpi slt, %2, %c0_i32_1 : i32
    %c0_i32_2 = arith.constant 0 : i32
    %5 = arith.cmpi slt, %1, %c0_i32_2 : i32
    %6 = arith.xori %4, %5 : i1
    %7 = arith.andi %6, %3 : i1
    %8 = arith.addi %2, %1 : i32
    %9 = arith.select %7, %8, %2 : i32
    %c2_i32_3 = arith.constant 2 : i32
    %10 = arith.muli %c2_i32_3, %arg1 : i32
    %c0_i32_4 = arith.constant 0 : i32
    %11 = arith.subi %c0_i32_4, %10 : i32
    %12 = arith.muli %9, %11 : i32
    %13 = arith.addi %arg1, %12 : i32
    %c0_i32_5 = arith.constant 0 : i32
    %c0_i32_6 = arith.constant 0 : i32
    return %c0_i32_5, %13 : i32, i32
  }
  func.func @transform_2(%arg0: i32, %arg1: i32) -> (i32, i32) {
    %c2_i32 = arith.constant 2 : i32
    %c0_i32 = arith.constant 0 : i32
    %0 = arith.cmpi eq, %c2_i32, %c0_i32 : i32
    %c1_i32 = arith.constant 1 : i32
    %1 = arith.select %0, %c1_i32, %c2_i32 : i32
    %2 = arith.remsi %arg0, %1 : i32
    %c0_i32_0 = arith.constant 0 : i32
    %3 = arith.cmpi ne, %2, %c0_i32_0 : i32
    %c0_i32_1 = arith.constant 0 : i32
    %4 = arith.cmpi slt, %2, %c0_i32_1 : i32
    %c0_i32_2 = arith.constant 0 : i32
    %5 = arith.cmpi slt, %1, %c0_i32_2 : i32
    %6 = arith.xori %4, %5 : i1
    %7 = arith.andi %6, %3 : i1
    %8 = arith.addi %2, %1 : i32
    %9 = arith.select %7, %8, %2 : i32
    %c2_i32_3 = arith.constant 2 : i32
    %10 = arith.muli %c2_i32_3, %arg1 : i32
    %c0_i32_4 = arith.constant 0 : i32
    %11 = arith.subi %c0_i32_4, %10 : i32
    %12 = arith.muli %9, %11 : i32
    %13 = arith.addi %arg1, %12 : i32
    %c0_i32_5 = arith.constant 0 : i32
    %c0_i32_6 = arith.constant 0 : i32
    return %c0_i32_5, %13 : i32, i32
  }
  func.func @transform_3(%arg0: i32, %arg1: i32) -> (i32, i32) {
    %c2_i32 = arith.constant 2 : i32
    %c0_i32 = arith.constant 0 : i32
    %0 = arith.cmpi eq, %c2_i32, %c0_i32 : i32
    %c1_i32 = arith.constant 1 : i32
    %1 = arith.select %0, %c1_i32, %c2_i32 : i32
    %2 = arith.remsi %arg0, %1 : i32
    %c0_i32_0 = arith.constant 0 : i32
    %3 = arith.cmpi ne, %2, %c0_i32_0 : i32
    %c0_i32_1 = arith.constant 0 : i32
    %4 = arith.cmpi slt, %2, %c0_i32_1 : i32
    %c0_i32_2 = arith.constant 0 : i32
    %5 = arith.cmpi slt, %1, %c0_i32_2 : i32
    %6 = arith.xori %4, %5 : i1
    %7 = arith.andi %6, %3 : i1
    %8 = arith.addi %2, %1 : i32
    %9 = arith.select %7, %8, %2 : i32
    %c2_i32_3 = arith.constant 2 : i32
    %10 = arith.muli %c2_i32_3, %arg1 : i32
    %c0_i32_4 = arith.constant 0 : i32
    %11 = arith.subi %c0_i32_4, %10 : i32
    %12 = arith.muli %9, %11 : i32
    %13 = arith.addi %arg1, %12 : i32
    %c0_i32_5 = arith.constant 0 : i32
    %c0_i32_6 = arith.constant 0 : i32
    return %13, %c0_i32_5 : i32, i32
  }
  func.func @transform_4(%arg0: i32, %arg1: i32) -> (i32, i32) {
    %c0_i32 = arith.constant 0 : i32
    %c0_i32_0 = arith.constant 0 : i32
    %c0_i32_1 = arith.constant 0 : i32
    return %c0_i32, %c0_i32_0 : i32, i32
  }
  func.func @transform_5(%arg0: i32, %arg1: i32) -> (i32, i32) {
    %c0_i32 = arith.constant 0 : i32
    %c0_i32_0 = arith.constant 0 : i32
    return %arg0, %c0_i32 : i32, i32
  }
}

</mosaic_0001>

<llo_original>
// kernel: feed_forward.1
$region0: #{feed_forward.1}
  #allocation0 [shape = 'u32[]', space=smem, size = 0x4, offset = 0x4, fixed_abs, tag = 'smem constant byte address 0x4 - core index']
  #allocation1 [shape = 'u32[144,128]{1,0:T(1,128)}', space=vmem, size = 0x12000, scoped, tag = 'internal scratch']
  #allocation2 [shape = 'f32[8,128]{1,0:T(8,128)}', space=vmem, size = 0x1000, scoped, tag = 'scratch operand']
  %s0 = inlined_call_operand.vmem [shape: f32[16,128], index: 0, kind: input, shape index: {}]
  %s1 = inlined_call_operand.hbm [shape: f32[128,128], index: 1, kind: input, shape index: {}]
  %s2 = inlined_call_operand.vmem [shape: f32[1,128], index: 2, kind: input, shape index: {}]
  %s3 = inlined_call_operand.hbm [shape: f32[128,128], index: 3, kind: input, shape index: {}]
  %s4 = inlined_call_operand.vmem [shape: f32[1,128], index: 4, kind: input, shape index: {}]
  %s5 = inlined_call_operand.vmem [shape: f32[16,128], index: 5, kind: output, shape index: {}]
  %s6 = sld [smem:[#allocation0]]
  $region73: #{feed_forward.1} parent=0
    _
  %s8 = ssub.s32 1, %s6
  %s9 = scalar_select 0, %s8, %s6
  $region1: #{feed_forward.1} parent=0
    #allocation3 [shape = 'u8[131072]{0}', space=vmem, size = 0x20000, scoped, tag = 'input window, operand 1']
    #allocation4 [shape = 's32[2]{0}', space=sflag, size = 0x8, scoped, tag = 'scoped memory for feed_forward.1']
    #allocation5 [shape = 'u8[131072]{0}', space=vmem, size = 0x20000, scoped, tag = 'input window, operand 3']
    #allocation6 [shape = 's32[2]{0}', space=sflag, size = 0x8, scoped, tag = 'scoped memory for feed_forward.1']
    %10 = vsyncpa [#allocation4], 0
    %s11 = scalar_lea.sflag [#allocation4], 1
    %12 = vsyncpa %s11, 0
    %13 = vsyncpa [#allocation6], 0
    %s14 = scalar_lea.sflag [#allocation6], 1
    %15 = vsyncpa %s14, 0
    loop: start=0, step=1, limit=4
    $region2: #{feed_forward.1} parent=1 // loop_pre_header
      _
    $region3: #{feed_forward.1} parent=1 // loop_header
      %s17 = sphi 0, %s21
      %p18 = scmp.ge.s32.totalorder %s17, 4
      %s24 = sphi 0, %s36
      %s25 = sphi 0, %s32
      %s26 = sphi 0, %s24
      %s27 = sphi 0, %s25
      %s28 = sphi 0, %s26
      %s29 = sphi 0, %s27
      %s39 = sphi 0, %s41
      %s42 = sphi 0, %s39
      %s43 = sphi 0, %s42
      %s59 = sphi 0, %s43
      %s97 = sphi 0, %s99
      %s100 = sphi 0, %s97
      %s101 = sphi 0, %s100
      %s117 = sphi 0, %s101
      %s155 = sphi 0, %s157
      %s158 = sphi 0, %s155
      %s159 = sphi 0, %s158
      %s175 = sphi 0, %s159
      %s213 = sphi 0, %s215
      %s216 = sphi 0, %s213
      %s217 = sphi 0, %s216
      %s233 = sphi 0, %s217
      %s237 = sphi 0, %s237
      %s239 = sphi 0, %s237
      %s240 = sphi 0, %s239
      %s254 = sphi 0, %s240
      %s260 = sphi 0, %s262
      %s263 = sphi 0, %s260
      %s264 = sphi 0, %s263
      %s280 = sphi 0, %s264
    $region4: #{feed_forward.1} parent=1 // loop_header_branch
      %20 = sbr.rel (%p18) target = $region8
    $region5: #{feed_forward.1} parent=1 // loop_body
      %s22 = ssub.s32 %s17, 1
      %s23 = ssub.s32 %s17, 2
      %s30 = sadd.s32 1, %s25
      %p31 = scmp.ge.s32.totalorder %s30, 1
      %s32 = scalar_select %p31, 0, %s30
      %s33 = sadd.s32 1, %s24
      %s34 = scalar_select %p31, %s33, %s24
      %p35 = scmp.ge.s32.totalorder %s34, 2
      %s36 = scalar_select %p35, 0, %s34
      %s37 = ssub.s32 %s24, %s36
      %p38 = scmp.eq.s32.totalorder %s37, 0
      %s40 = sadd.s32 %s39, 1
      %s41 = scalar_select %p38, %s39, %s40
      %p44 = pneg %p38
      %p45 = scmp.eq.s32.totalorder %s17, 1
      %p46 = por %p44, %p45
      %p47 = scmp.ne.s32.totalorder %s39, %s42
      %p48 = scmp.eq.s32.totalorder %s17, 0
      %p49 = por %p47, %p48
      %p50 = scmp.ne.s32.totalorder %s39, %s42
      %p51 = scmp.eq.s32.totalorder %s22, 1
      %p52 = por %p50, %p51
      %p53 = scmp.ne.s32.totalorder %s42, %s43
      %p54 = scmp.eq.s32.totalorder %s22, 0
      %p55 = por %p53, %p54
      %p56 = scmp.ne.s32.totalorder %s42, %s43
      %p57 = scmp.eq.s32.totalorder %s23, 1
      %p58 = por %p56, %p57
      %p60 = scmp.ne.s32.totalorder %s43, %s59
      %p61 = scmp.eq.s32.totalorder %s23, 0
      %p62 = por %p60, %p61
      %p63 = scmp.lt.s32.totalorder %s24, 0
      %s64 = ssub.s32 0, %s24
      %s65 = scalar_select %p63, %s64, %s24
      %s66 = sand.u32 %s65, 1
      %s67 = ssub.s32 0, %s66
      %s68 = scalar_select %p63, %s67, %s66
      %p69 = scmp.ne.s32.totalorder %s68, 0
      %p70 = scmp.lt.s32.totalorder %s68, 0
      %p71 = pnand %p70, %p69
      %p72 = pneg %p71
      %s73 = sadd.s32 %s68, 2
      %s74 = scalar_select %p72, %s73, %s68
      %s75 = smul.u32 %s25, 2
      %s76 = ssub.s32 0, %s75
      %s77 = smul.u32 %s74, %s76
      %s78 = sadd.s32 %s25, %s77
      %p79 = scmp.lt.s32.totalorder %s36, 0
      %s80 = ssub.s32 0, %s36
      %s81 = scalar_select %p79, %s80, %s36
      %s82 = sand.u32 %s81, 1
      %s83 = ssub.s32 0, %s82
      %s84 = scalar_select %p79, %s83, %s82
      %p85 = scmp.ne.s32.totalorder %s84, 0
      %p86 = scmp.lt.s32.totalorder %s84, 0
      %p87 = pnand %p86, %p85
      %p88 = pneg %p87
      %s89 = sadd.s32 %s84, 2
      %s90 = scalar_select %p88, %s89, %s84
      %s91 = smul.u32 %s32, 2
      %s92 = ssub.s32 0, %s91
      %s93 = smul.u32 %s90, %s92
      %s94 = sadd.s32 %s32, %s93
      %s95 = ssub.s32 %s78, %s94
      %p96 = scmp.eq.s32.totalorder %s95, 0
      %s98 = sadd.s32 %s97, 1
      %s99 = scalar_select %p96, %s97, %s98
      %p102 = pneg %p96
      %p103 = scmp.eq.s32.totalorder %s17, 1
      %p104 = por %p102, %p103
      %p105 = scmp.ne.s32.totalorder %s97, %s100
      %p106 = scmp.eq.s32.totalorder %s17, 0
      %p107 = por %p105, %p106
      %p108 = scmp.ne.s32.totalorder %s97, %s100
      %p109 = scmp.eq.s32.totalorder %s22, 1
      %p110 = por %p108, %p109
      %p111 = scmp.ne.s32.totalorder %s100, %s101
      %p112 = scmp.eq.s32.totalorder %s22, 0
      %p113 = por %p111, %p112
      %p114 = scmp.ne.s32.totalorder %s100, %s101
      %p115 = scmp.eq.s32.totalorder %s23, 1
      %p116 = por %p114, %p115
      %p118 = scmp.ne.s32.totalorder %s101, %s117
      %p119 = scmp.eq.s32.totalorder %s23, 0
      %p120 = por %p118, %p119
      %p121 = scmp.lt.s32.totalorder %s24, 0
      %s122 = ssub.s32 0, %s24
      %s123 = scalar_select %p121, %s122, %s24
      %s124 = sand.u32 %s123, 1
      %s125 = ssub.s32 0, %s124
      %s126 = scalar_select %p121, %s125, %s124
      %p127 = scmp.ne.s32.totalorder %s126, 0
      %p128 = scmp.lt.s32.totalorder %s126, 0
      %p129 = pnand %p128, %p127
      %p130 = pneg %p129
      %s131 = sadd.s32 %s126, 2
      %s132 = scalar_select %p130, %s131, %s126
      %s133 = smul.u32 %s25, 2
      %s134 = ssub.s32 0, %s133
      %s135 = smul.u32 %s132, %s134
      %s136 = sadd.s32 %s25, %s135
      %p137 = scmp.lt.s32.totalorder %s36, 0
      %s138 = ssub.s32 0, %s36
      %s139 = scalar_select %p137, %s138, %s36
      %s140 = sand.u32 %s139, 1
      %s141 = ssub.s32 0, %s140
      %s142 = scalar_select %p137, %s141, %s140
      %p143 = scmp.ne.s32.totalorder %s142, 0
      %p144 = scmp.lt.s32.totalorder %s142, 0
      %p145 = pnand %p144, %p143
      %p146 = pneg %p145
      %s147 = sadd.s32 %s142, 2
      %s148 = scalar_select %p146, %s147, %s142
      %s149 = smul.u32 %s32, 2
      %s150 = ssub.s32 0, %s149
      %s151 = smul.u32 %s148, %s150
      %s152 = sadd.s32 %s32, %s151
      %s153 = ssub.s32 %s136, %s152
      %p154 = scmp.eq.s32.totalorder %s153, 0
      %s156 = sadd.s32 %s155, 1
      %s157 = scalar_select %p154, %s155, %s156
      %p160 = pneg %p154
      %p161 = scmp.eq.s32.totalorder %s17, 1
      %p162 = por %p160, %p161
      %p163 = scmp.ne.s32.totalorder %s155, %s158
      %p164 = scmp.eq.s32.totalorder %s17, 0
      %p165 = por %p163, %p164
      %p166 = scmp.ne.s32.totalorder %s155, %s158
      %p167 = scmp.eq.s32.totalorder %s22, 1
      %p168 = por %p166, %p167
      %p169 = scmp.ne.s32.totalorder %s158, %s159
      %p170 = scmp.eq.s32.totalorder %s22, 0
      %p171 = por %p169, %p170
      %p172 = scmp.ne.s32.totalorder %s158, %s159
      %p173 = scmp.eq.s32.totalorder %s23, 1
      %p174 = por %p172, %p173
      %p176 = scmp.ne.s32.totalorder %s159, %s175
      %p177 = scmp.eq.s32.totalorder %s23, 0
      %p178 = por %p176, %p177
      %p179 = scmp.lt.s32.totalorder %s24, 0
      %s180 = ssub.s32 0, %s24
      %s181 = scalar_select %p179, %s180, %s24
      %s182 = sand.u32 %s181, 1
      %s183 = ssub.s32 0, %s182
      %s184 = scalar_select %p179, %s183, %s182
      %p185 = scmp.ne.s32.totalorder %s184, 0
      %p186 = scmp.lt.s32.totalorder %s184, 0
      %p187 = pnand %p186, %p185
      %p188 = pneg %p187
      %s189 = sadd.s32 %s184, 2
      %s190 = scalar_select %p188, %s189, %s184
      %s191 = smul.u32 %s25, 2
      %s192 = ssub.s32 0, %s191
      %s193 = smul.u32 %s190, %s192
      %s194 = sadd.s32 %s25, %s193
      %p195 = scmp.lt.s32.totalorder %s36, 0
      %s196 = ssub.s32 0, %s36
      %s197 = scalar_select %p195, %s196, %s36
      %s198 = sand.u32 %s197, 1
      %s199 = ssub.s32 0, %s198
      %s200 = scalar_select %p195, %s199, %s198
      %p201 = scmp.ne.s32.totalorder %s200, 0
      %p202 = scmp.lt.s32.totalorder %s200, 0
      %p203 = pnand %p202, %p201
      %p204 = pneg %p203
      %s205 = sadd.s32 %s200, 2
      %s206 = scalar_select %p204, %s205, %s200
      %s207 = smul.u32 %s32, 2
      %s208 = ssub.s32 0, %s207
      %s209 = smul.u32 %s206, %s208
      %s210 = sadd.s32 %s32, %s209
      %s211 = ssub.s32 %s194, %s210
      %p212 = scmp.eq.s32.totalorder %s211, 0
      %s214 = sadd.s32 %s213, 1
      %s215 = scalar_select %p212, %s213, %s214
      %p218 = pneg %p212
      %p219 = scmp.eq.s32.totalorder %s17, 1
      %p220 = por %p218, %p219
      %p221 = scmp.ne.s32.totalorder %s213, %s216
      %p222 = scmp.eq.s32.totalorder %s17, 0
      %p223 = por %p221, %p222
      %p224 = scmp.ne.s32.totalorder %s213, %s216
      %p225 = scmp.eq.s32.totalorder %s22, 1
      %p226 = por %p224, %p225
      %p227 = scmp.ne.s32.totalorder %s216, %s217
      %p228 = scmp.eq.s32.totalorder %s22, 0
      %p229 = por %p227, %p228
      %p230 = scmp.ne.s32.totalorder %s216, %s217
      %p231 = scmp.eq.s32.totalorder %s23, 1
      %p232 = por %p230, %p231
      %p234 = scmp.ne.s32.totalorder %s217, %s233
      %p235 = scmp.eq.s32.totalorder %s23, 0
      %p236 = por %p234, %p235
      %s238 = sadd.s32 %s237, 1
      %p241 = scmp.eq.s32.totalorder %s17, 1
      %p242 = scmp.ne.s32.totalorder %s237, %s239
      %p243 = scmp.eq.s32.totalorder %s17, 0
      %p244 = por %p242, %p243
      %p245 = scmp.ne.s32.totalorder %s237, %s239
      %p246 = scmp.eq.s32.totalorder %s22, 1
      %p247 = por %p245, %p246
      %p248 = scmp.ne.s32.totalorder %s239, %s240
      %p249 = scmp.eq.s32.totalorder %s22, 0
      %p250 = por %p248, %p249
      %p251 = scmp.ne.s32.totalorder %s239, %s240
      %p252 = scmp.eq.s32.totalorder %s23, 1
      %p253 = por %p251, %p252
      %p255 = scmp.ne.s32.totalorder %s240, %s254
      %p256 = scmp.eq.s32.totalorder %s23, 0
      %p257 = por %p255, %p256
      %s258 = ssub.s32 %s24, %s36
      %p259 = scmp.eq.s32.totalorder %s258, 0
      %s261 = sadd.s32 %s260, 1
      %s262 = scalar_select %p259, %s260, %s261
      %p265 = pneg %p259
      %p266 = scmp.eq.s32.totalorder %s17, 1
      %p267 = por %p265, %p266
      %p268 = scmp.ne.s32.totalorder %s260, %s263
      %p269 = scmp.eq.s32.totalorder %s17, 0
      %p270 = por %p268, %p269
      %p271 = scmp.ne.s32.totalorder %s260, %s263
      %p272 = scmp.eq.s32.totalorder %s22, 1
      %p273 = por %p271, %p272
      %p274 = scmp.ne.s32.totalorder %s263, %s264
      %p275 = scmp.eq.s32.totalorder %s22, 0
      %p276 = por %p274, %p275
      %p277 = scmp.ne.s32.totalorder %s263, %s264
      %p278 = scmp.eq.s32.totalorder %s23, 1
      %p279 = por %p277, %p278
      %p281 = scmp.ne.s32.totalorder %s264, %s280
      %p282 = scmp.eq.s32.totalorder %s23, 0
      %p283 = por %p281, %p282
      %p284 = scmp.le.s32.totalorder 1, %s17
      %p285 = scmp.lt.s32.totalorder %s17, 3
      %p286 = pnand %p284, %p285
      %p287 = pneg %p286
      // Predicated region
      $region9: #{feed_forward.1} parent=5 // pred_check
        _
      $region10: #{feed_forward.1} parent=5 // pred_check_branch
        %289 = sbr.rel (%p286) target = $region12
      $region11: #{feed_forward.1} parent=5 // pred_region
        %s290 = ssub.s32 %s17, 1
        // Predicated region
        $region13: #{feed_forward.1} parent=11 // pred_check
          %p291 = pneg %p250
        $region14: #{feed_forward.1} parent=11 // pred_check_branch
          %293 = sbr.rel (%p291) target = $region16
        $region15: #{feed_forward.1} parent=11 // pred_region
          _
        $region16: #{feed_forward.1} parent=11 // pred_fallthru
          _
      $region12: #{feed_forward.1} parent=5 // pred_fallthru
        _
      %p294 = scmp.lt.s32.totalorder %s17, 2
      // Predicated region
      $region17: #{feed_forward.1} parent=5 // pred_check
        %p295 = pneg %p294
      $region18: #{feed_forward.1} parent=5 // pred_check_branch
        %297 = sbr.rel (%p295) target = $region20
      $region19: #{feed_forward.1} parent=5 // pred_region
        // Predicated region
        $region21: #{feed_forward.1} parent=19 // pred_check
          %p298 = pneg %p49
        $region22: #{feed_forward.1} parent=19 // pred_check_branch
          %300 = sbr.rel (%p298) target = $region24
        $region23: #{feed_forward.1} parent=19 // pred_region
          %p301 = scmp.lt.s32.totalorder %s24, 1
          %s302 = scalar_select %p301, %s24, 1
          %s303 = smul.addr %s302, 8
          %s304 = scalar_lea.vmem %s0, %s303
        $region24: #{feed_forward.1} parent=19 // pred_fallthru
          _
        // Predicated region
        $region25: #{feed_forward.1} parent=19 // pred_check
          %p305 = pneg %p107
        $region26: #{feed_forward.1} parent=19 // pred_check_branch
          %307 = sbr.rel (%p305) target = $region28
        $region27: #{feed_forward.1} parent=19 // pred_region
          %s308 = sand.u32 %s97, 1
          %s309 = scalar_lea.sflag [#allocation4], %s308
          %s310 = sand.u32 %s97, 1
          %s311 = smul.addr %s310, 128
          %s312 = scalar_lea.vmem [#allocation3], %s311
          %p313 = scmp.lt.s32.totalorder %s24, 0
          %s314 = ssub.s32 0, %s24
          %s315 = scalar_select %p313, %s314, %s24
          %s316 = sand.u32 %s315, 1
          %s317 = ssub.s32 0, %s316
          %s318 = scalar_select %p313, %s317, %s316
          %p319 = scmp.ne.s32.totalorder %s318, 0
          %p320 = scmp.lt.s32.totalorder %s318, 0
          %p321 = pnand %p320, %p319
          %p322 = pneg %p321
          %s323 = sadd.s32 %s318, 2
          %s324 = scalar_select %p322, %s323, %s318
          %s325 = smul.u32 %s25, 2
          %s326 = ssub.s32 0, %s325
          %s327 = smul.u32 %s324, %s326
          %s328 = sadd.s32 %s25, %s327
          %s330 = ssub.s32 2048, 2048
          %331 = vsyncadd %s309, %s330
          %s332 = smul.addr %s328, 128
          %s333 = scalar_lea.hbm %s1, %s332
          %s334 = sshll.u32 %s312, 4
          %s335 = int_to_ptr.vmem [resolvable:$true] %s334
          %340 = dma.hbm_to_vmem [thread:$0]  %s333, 2048, %s335, %s309, 128, 128, 8
        $region28: #{feed_forward.1} parent=19 // pred_fallthru
          _
        // Predicated region
        $region29: #{feed_forward.1} parent=19 // pred_check
          %p341 = pneg %p165
        $region30: #{feed_forward.1} parent=19 // pred_check_branch
          %343 = sbr.rel (%p341) target = $region32
        $region31: #{feed_forward.1} parent=19 // pred_region
          %p344 = scmp.lt.s32.totalorder %s24, 0
          %s345 = ssub.s32 0, %s24
          %s346 = scalar_select %p344, %s345, %s24
          %s347 = sand.u32 %s346, 1
          %s348 = ssub.s32 0, %s347
          %s349 = scalar_select %p344, %s348, %s347
          %p350 = scmp.ne.s32.totalorder %s349, 0
          %p351 = scmp.lt.s32.totalorder %s349, 0
          %p352 = pnand %p351, %p350
          %p353 = pneg %p352
          %s354 = sadd.s32 %s349, 2
          %s355 = scalar_select %p353, %s354, %s349
          %s356 = smul.u32 %s25, 2
          %s357 = ssub.s32 0, %s356
          %s358 = smul.u32 %s355, %s357
          %s359 = sadd.s32 %s25, %s358
          %p360 = scmp.lt.s32.totalorder %s359, 0
          %s361 = scalar_select %p360, %s359, 0
          %s362 = scalar_lea.vmem %s2, %s361
          %p363 = scmp.lt.s32.totalorder %s24, 0
          %s364 = ssub.s32 0, %s24
          %s365 = scalar_select %p363, %s364, %s24
          %s366 = sand.u32 %s365, 1
          %s367 = ssub.s32 0, %s366
          %s368 = scalar_select %p363, %s367, %s366
          %p369 = scmp.ne.s32.totalorder %s368, 0
          %p370 = scmp.lt.s32.totalorder %s368, 0
          %p371 = pnand %p370, %p369
          %p372 = pneg %p371
          %s373 = sadd.s32 %s368, 2
          %s374 = scalar_select %p372, %s373, %s368
          %s375 = smul.u32 %s25, 2
          %s376 = ssub.s32 0, %s375
          %s377 = smul.u32 %s374, %s376
          %s378 = sadd.s32 %s25, %s377
        $region32: #{feed_forward.1} parent=19 // pred_fallthru
          _
        // Predicated region
        $region33: #{feed_forward.1} parent=19 // pred_check
          %p379 = pneg %p223
        $region34: #{feed_forward.1} parent=19 // pred_check_branch
          %381 = sbr.rel (%p379) target = $region36
        $region35: #{feed_forward.1} parent=19 // pred_region
          %s382 = sand.u32 %s213, 1
          %s383 = scalar_lea.sflag [#allocation6], %s382
          %s384 = sand.u32 %s213, 1
          %s385 = smul.addr %s384, 128
          %s386 = scalar_lea.vmem [#allocation5], %s385
          %p387 = scmp.lt.s32.totalorder %s24, 0
          %s388 = ssub.s32 0, %s24
          %s389 = scalar_select %p387, %s388, %s24
          %s390 = sand.u32 %s389, 1
          %s391 = ssub.s32 0, %s390
          %s392 = scalar_select %p387, %s391, %s390
          %p393 = scmp.ne.s32.totalorder %s392, 0
          %p394 = scmp.lt.s32.totalorder %s392, 0
          %p395 = pnand %p394, %p393
          %p396 = pneg %p395
          %s397 = sadd.s32 %s392, 2
          %s398 = scalar_select %p396, %s397, %s392
          %s399 = smul.u32 %s25, 2
          %s400 = ssub.s32 0, %s399
          %s401 = smul.u32 %s398, %s400
          %s402 = sadd.s32 %s25, %s401
          %s403 = smul.u32 16, %s402
          %s405 = ssub.s32 2048, 2048
          %406 = vsyncadd %s383, %s405
          %s407 = smul.addr %s403, 128
          %s408 = scalar_lea.hbm %s3, %s407
          %s409 = sshll.u32 %s386, 4
          %s410 = int_to_ptr.vmem [resolvable:$true] %s409
          %415 = dma.hbm_to_vmem [thread:$0]  %s408, 2048, %s410, %s383, 128, 128, 8
        $region36: #{feed_forward.1} parent=19 // pred_fallthru
          _
      $region20: #{feed_forward.1} parent=5 // pred_fallthru
        _
      %p416 = scmp.le.s32.totalorder 1, %s17
      %p417 = scmp.lt.s32.totalorder %s17, 3
      %p418 = pnand %p416, %p417
      %p419 = pneg %p418
      // Predicated region
      $region37: #{feed_forward.1} parent=5 // pred_check
        _
      $region38: #{feed_forward.1} parent=5 // pred_check_branch
        %421 = sbr.rel (%p418) target = $region40
      $region39: #{feed_forward.1} parent=5 // pred_region
        %s422 = ssub.s32 %s17, 1
        %s423 = sand.u32 %s100, 1
        %s424 = scalar_lea.sflag [#allocation4], %s423
        %s425 = sand.u32 %s100, 1
        %s426 = smul.addr %s425, 128
        %s427 = scalar_lea.vmem [#allocation3], %s426
        // Predicated region
        $region41: #{feed_forward.1} parent=39 // pred_check
          %p428 = pneg %p113
        $region42: #{feed_forward.1} parent=39 // pred_check_branch
          %430 = sbr.rel (%p428) target = $region44
        $region43: #{feed_forward.1} parent=39 // pred_region
          %431 = dma.done %s424, 2048
        $region44: #{feed_forward.1} parent=39 // pred_fallthru
          _
        %s432 = sand.u32 %s216, 1
        %s433 = scalar_lea.sflag [#allocation6], %s432
        %s434 = sand.u32 %s216, 1
        %s435 = smul.addr %s434, 128
        %s436 = scalar_lea.vmem [#allocation5], %s435
        // Predicated region
        $region45: #{feed_forward.1} parent=39 // pred_check
          %p437 = pneg %p229
        $region46: #{feed_forward.1} parent=39 // pred_check_branch
          %439 = sbr.rel (%p437) target = $region48
        $region47: #{feed_forward.1} parent=39 // pred_region
          %440 = dma.done %s433, 2048
        $region48: #{feed_forward.1} parent=39 // pred_fallthru
          _
        %p441 = scmp.lt.s32.totalorder %s26, 1
        %s442 = scalar_select %p441, %s26, 1
        %s443 = smul.addr %s442, 8
        %s444 = scalar_lea.vmem %s0, %s443
        %p445 = pneg %p55
        %p446 = pneg %p52
        %s447 = sand.u32 %s100, 1
        %s448 = scalar_lea.sflag [#allocation4], %s447
        %s449 = sand.u32 %s100, 1
        %s450 = smul.addr %s449, 128
        %s451 = scalar_lea.vmem [#allocation3], %s450
        %p452 = pneg %p113
        %p453 = pneg %p110
        %p454 = scmp.lt.s32.totalorder %s26, 0
        %s455 = ssub.s32 0, %s26
        %s456 = scalar_select %p454, %s455, %s26
        %s457 = sand.u32 %s456, 1
        %s458 = ssub.s32 0, %s457
        %s459 = scalar_select %p454, %s458, %s457
        %p460 = scmp.ne.s32.totalorder %s459, 0
        %p461 = scmp.lt.s32.totalorder %s459, 0
        %p462 = pnand %p461, %p460
        %p463 = pneg %p462
        %s464 = sadd.s32 %s459, 2
        %s465 = scalar_select %p463, %s464, %s459
        %s466 = smul.u32 %s27, 2
        %s467 = ssub.s32 0, %s466
        %s468 = smul.u32 %s465, %s467
        %s469 = sadd.s32 %s27, %s468
        %p470 = scmp.lt.s32.totalorder %s469, 0
        %s471 = scalar_select %p470, %s469, 0
        %s472 = scalar_lea.vmem %s2, %s471
        %p473 = pneg %p171
        %p474 = pneg %p168
        %s475 = sand.u32 %s216, 1
        %s476 = scalar_lea.sflag [#allocation6], %s475
        %s477 = sand.u32 %s216, 1
        %s478 = smul.addr %s477, 128
        %s479 = scalar_lea.vmem [#allocation5], %s478
        %p480 = pneg %p229
        %p481 = pneg %p226
        %p482 = pneg %p250
        %p483 = pneg %p247
        %p484 = pneg %p276
        %p485 = pneg %p273
        %p486 = scmp.lt.s32.totalorder %s26, 1
        %s487 = scalar_select %p486, %s26, 1
        %s488 = smul.addr %s487, 8
        %s489 = scalar_lea.vmem %s5, %s488
        %p490 = scmp.lt.s32.totalorder %s26, 1
        %s491 = scalar_select %p490, %s26, 1
        %s492 = smul.addr %s491, 8
        %s493 = scalar_lea.vmem %s0, %s492
        %p494 = scmp.lt.s32.totalorder %s26, 0
        %s495 = ssub.s32 0, %s26
        %s496 = scalar_select %p494, %s495, %s26
        %s497 = sand.u32 %s496, 1
        %s498 = ssub.s32 0, %s497
        %s499 = scalar_select %p494, %s498, %s497
        %p500 = scmp.ne.s32.totalorder %s499, 0
        %p501 = scmp.lt.s32.totalorder %s499, 0
        %p502 = pnand %p501, %p500
        %p503 = pneg %p502
        %s504 = sadd.s32 %s499, 2
        %s505 = scalar_select %p503, %s504, %s499
        %s506 = smul.u32 %s27, 2
        %s507 = ssub.s32 0, %s506
        %s508 = smul.u32 %s505, %s507
        %s509 = sadd.s32 %s27, %s508
        %p510 = scmp.lt.s32.totalorder %s26, 0
        %s511 = ssub.s32 0, %s26
        %s512 = scalar_select %p510, %s511, %s26
        %s513 = sand.u32 %s512, 1
        %s514 = ssub.s32 0, %s513
        %s515 = scalar_select %p510, %s514, %s513
        %p516 = scmp.ne.s32.totalorder %s515, 0
        %p517 = scmp.lt.s32.totalorder %s515, 0
        %p518 = pnand %p517, %p516
        %p519 = pneg %p518
        %s520 = sadd.s32 %s515, 2
        %s521 = scalar_select %p519, %s520, %s515
        %s522 = smul.u32 %s27, 2
        %s523 = ssub.s32 0, %s522
        %s524 = smul.u32 %s521, %s523
        %s525 = sadd.s32 %s27, %s524
        %p526 = scmp.lt.s32.totalorder %s525, 0
        %s527 = scalar_select %p526, %s525, 0
        %s528 = scalar_lea.vmem %s2, %s527
        %p529 = scmp.lt.s32.totalorder %s26, 0
        %s530 = ssub.s32 0, %s26
        %s531 = scalar_select %p529, %s530, %s26
        %s532 = sand.u32 %s531, 1
        %s533 = ssub.s32 0, %s532
        %s534 = scalar_select %p529, %s533, %s532
        %p535 = scmp.ne.s32.totalorder %s534, 0
        %p536 = scmp.lt.s32.totalorder %s534, 0
        %p537 = pnand %p536, %p535
        %p538 = pneg %p537
        %s539 = sadd.s32 %s534, 2
        %s540 = scalar_select %p538, %s539, %s534
        %s541 = smul.u32 %s27, 2
        %s542 = ssub.s32 0, %s541
        %s543 = smul.u32 %s540, %s542
        %s544 = sadd.s32 %s27, %s543
        %p545 = scmp.lt.s32.totalorder %s26, 0
        %s546 = ssub.s32 0, %s26
        %s547 = scalar_select %p545, %s546, %s26
        %s548 = sand.u32 %s547, 1
        %s549 = ssub.s32 0, %s548
        %s550 = scalar_select %p545, %s549, %s548
        %p551 = scmp.ne.s32.totalorder %s550, 0
        %p552 = scmp.lt.s32.totalorder %s550, 0
        %p553 = pnand %p552, %p551
        %p554 = pneg %p553
        %s555 = sadd.s32 %s550, 2
        %s556 = scalar_select %p554, %s555, %s550
        %s557 = smul.u32 %s27, 2
        %s558 = ssub.s32 0, %s557
        %s559 = smul.u32 %s556, %s558
        %s560 = sadd.s32 %s27, %s559
        %s561 = smul.u32 16, %s560
        %p562 = scmp.lt.s32.totalorder %s26, 1
        %s563 = scalar_select %p562, %s26, 1
        %s564 = smul.addr %s563, 8
        %s565 = scalar_lea.vmem %s5, %s564
        %v566 = vld [vmem:[%s493] sm:$0xff]
        %v567 = vld [vmem:[%s427] sm:$0xff]
        %v568 = vld [vmem:[%s427 + $0x8] sm:$0xff]
        %v569 = vld [vmem:[%s427 + $0x10] sm:$0xff]
        %v570 = vld [vmem:[%s427 + $0x18] sm:$0xff]
        %v571 = vld [vmem:[%s427 + $0x20] sm:$0xff]
        %v572 = vld [vmem:[%s427 + $0x28] sm:$0xff]
        %v573 = vld [vmem:[%s427 + $0x30] sm:$0xff]
        %v574 = vld [vmem:[%s427 + $0x38] sm:$0xff]
        %v575 = vld [vmem:[%s427 + $0x40] sm:$0xff]
        %v576 = vld [vmem:[%s427 + $0x48] sm:$0xff]
        %v577 = vld [vmem:[%s427 + $0x50] sm:$0xff]
        %v578 = vld [vmem:[%s427 + $0x58] sm:$0xff]
        %v579 = vld [vmem:[%s427 + $0x60] sm:$0xff]
        %v580 = vld [vmem:[%s427 + $0x68] sm:$0xff]
        %v581 = vld [vmem:[%s427 + $0x70] sm:$0xff]
        %v582 = vld [vmem:[%s427 + $0x78] sm:$0xff]
        %v583 = vld [vmem:[%s528] sm:$0x1]
        %v585 = vlaneseq
        %v586 = vshrl.u32 %v585, 7
        %v587 = vsub.s32 0, %v586
        %v588 = vrot.slane %v583, %v587
        %590 = vmatprep.subr.mxu0 0.0
        %591 = vmatpush1.msra.mxu0 %v582
        %592 = vmatprep.subr.mxu0 0.0
        %593 = vmatpush1.msra.mxu0 %v581
        %594 = vmatprep.subr.mxu0 0.0
        %595 = vmatpush1.msra.mxu0 %v580
        %596 = vmatprep.subr.mxu0 0.0
        %597 = vmatpush1.msra.mxu0 %v579
        %598 = vmatprep.subr.mxu0 0.0
        %599 = vmatpush1.msra.mxu0 %v578
        %600 = vmatprep.subr.mxu0 0.0
        %601 = vmatpush1.msra.mxu0 %v577
        %602 = vmatprep.subr.mxu0 0.0
        %603 = vmatpush1.msra.mxu0 %v576
        %604 = vmatprep.subr.mxu0 0.0
        %605 = vmatpush1.msra.mxu0 %v575
        %606 = vmatprep.subr.mxu0 0.0
        %607 = vmatpush1.msra.mxu0 %v574
        %608 = vmatprep.subr.mxu0 0.0
        %609 = vmatpush1.msra.mxu0 %v573
        %610 = vmatprep.subr.mxu0 0.0
        %611 = vmatpush1.msra.mxu0 %v572
        %612 = vmatprep.subr.mxu0 0.0
        %613 = vmatpush1.msra.mxu0 %v571
        %614 = vmatprep.subr.mxu0 0.0
        %615 = vmatpush1.msra.mxu0 %v570
        %616 = vmatprep.subr.mxu0 0.0
        %617 = vmatpush1.msra.mxu0 %v569
        %618 = vmatprep.subr.mxu0 0.0
        %619 = vmatpush1.msra.mxu0 %v568
        %620 = vmatprep.subr.mxu0 0.0
        %621 = vmatpush1.msra.mxu0 %v567
        %622 = vmatprep.subr.mxu0 0.0
        %623 = vmatpush2.msra.mxu0 0.0
        %624 = vmatprep.subr.mxu0 0.0
        %625 = vmatpush2.msra.mxu0 0.0
        %626 = vmatprep.subr.mxu0 0.0
        %627 = vmatpush2.msra.mxu0 0.0
        %628 = vmatprep.subr.mxu0 0.0
        %629 = vmatpush2.msra.mxu0 0.0
        %630 = vmatprep.subr.mxu0 0.0
        %631 = vmatpush2.msra.mxu0 0.0
        %632 = vmatprep.subr.mxu0 0.0
        %633 = vmatpush2.msra.mxu0 0.0
        %634 = vmatprep.subr.mxu0 0.0
        %635 = vmatpush2.msra.mxu0 0.0
        %636 = vmatprep.subr.mxu0 0.0
        %637 = vmatpush2.msra.mxu0 0.0
        %638 = vmatprep.subr.mxu0 0.0
        %639 = vmatpush2.msra.mxu0 0.0
        %640 = vmatprep.subr.mxu0 0.0
        %641 = vmatpush2.msra.mxu0 0.0
        %642 = vmatprep.subr.mxu0 0.0
        %643 = vmatpush2.msra.mxu0 0.0
        %644 = vmatprep.subr.mxu0 0.0
        %645 = vmatpush2.msra.mxu0 0.0
        %646 = vmatprep.subr.mxu0 0.0
        %647 = vmatpush2.msra.mxu0 0.0
        %648 = vmatprep.subr.mxu0 0.0
        %649 = vmatpush2.msra.mxu0 0.0
        %650 = vmatprep.subr.mxu0 0.0
        %651 = vmatpush2.msra.mxu0 0.0
        %652 = vmatprep.subr.mxu0 0.0
        %653 = vmatpush2.msra.mxu0 0.0
        %654 = vmatprep.mubr.f32.mxu0 0.0
        %655 = vmatmul.mubr.f32.gmra.mxu0 %v566
        %v656 = vpop.f32.mrf.mxu0
        %v657 = vadd.f32 %v588, %v656
        %v658 = vpop.f32.mrf.mxu0
        %659 = vdwg.mxu0
        %v660 = vmax.f32 %v657, 0.0
        %v661 = vld [vmem:[%s436] sm:$0xff]
        %v662 = vld [vmem:[%s436 + $0x8] sm:$0xff]
        %v663 = vld [vmem:[%s436 + $0x10] sm:$0xff]
        %v664 = vld [vmem:[%s436 + $0x18] sm:$0xff]
        %v665 = vld [vmem:[%s436 + $0x20] sm:$0xff]
        %v666 = vld [vmem:[%s436 + $0x28] sm:$0xff]
        %v667 = vld [vmem:[%s436 + $0x30] sm:$0xff]
        %v668 = vld [vmem:[%s436 + $0x38] sm:$0xff]
        %v669 = vld [vmem:[%s436 + $0x40] sm:$0xff]
        %v670 = vld [vmem:[%s436 + $0x48] sm:$0xff]
        %v671 = vld [vmem:[%s436 + $0x50] sm:$0xff]
        %v672 = vld [vmem:[%s436 + $0x58] sm:$0xff]
        %v673 = vld [vmem:[%s436 + $0x60] sm:$0xff]
        %v674 = vld [vmem:[%s436 + $0x68] sm:$0xff]
        %v675 = vld [vmem:[%s436 + $0x70] sm:$0xff]
        %v676 = vld [vmem:[%s436 + $0x78] sm:$0xff]
        %677 = vmatprep.subr.mxu0 0.0
        %678 = vmatpush1.msra.mxu0 %v676
        %679 = vmatprep.subr.mxu0 0.0
        %680 = vmatpush1.msra.mxu0 %v675
        %681 = vmatprep.subr.mxu0 0.0
        %682 = vmatpush1.msra.mxu0 %v674
        %683 = vmatprep.subr.mxu0 0.0
        %684 = vmatpush1.msra.mxu0 %v673
        %685 = vmatprep.subr.mxu0 0.0
        %686 = vmatpush1.msra.mxu0 %v672
        %687 = vmatprep.subr.mxu0 0.0
        %688 = vmatpush1.msra.mxu0 %v671
        %689 = vmatprep.subr.mxu0 0.0
        %690 = vmatpush1.msra.mxu0 %v670
        %691 = vmatprep.subr.mxu0 0.0
        %692 = vmatpush1.msra.mxu0 %v669
        %693 = vmatprep.subr.mxu0 0.0
        %694 = vmatpush1.msra.mxu0 %v668
        %695 = vmatprep.subr.mxu0 0.0
        %696 = vmatpush1.msra.mxu0 %v667
        %697 = vmatprep.subr.mxu0 0.0
        %698 = vmatpush1.msra.mxu0 %v666
        %699 = vmatprep.subr.mxu0 0.0
        %700 = vmatpush1.msra.mxu0 %v665
        %701 = vmatprep.subr.mxu0 0.0
        %702 = vmatpush1.msra.mxu0 %v664
        %703 = vmatprep.subr.mxu0 0.0
        %704 = vmatpush1.msra.mxu0 %v663
        %705 = vmatprep.subr.mxu0 0.0
        %706 = vmatpush1.msra.mxu0 %v662
        %707 = vmatprep.subr.mxu0 0.0
        %708 = vmatpush1.msra.mxu0 %v661
        %709 = vmatprep.subr.mxu0 0.0
        %710 = vmatpush2.msra.mxu0 0.0
        %711 = vmatprep.subr.mxu0 0.0
        %712 = vmatpush2.msra.mxu0 0.0
        %713 = vmatprep.subr.mxu0 0.0
        %714 = vmatpush2.msra.mxu0 0.0
        %715 = vmatprep.subr.mxu0 0.0
        %716 = vmatpush2.msra.mxu0 0.0
        %717 = vmatprep.subr.mxu0 0.0
        %718 = vmatpush2.msra.mxu0 0.0
        %719 = vmatprep.subr.mxu0 0.0
        %720 = vmatpush2.msra.mxu0 0.0
        %721 = vmatprep.subr.mxu0 0.0
        %722 = vmatpush2.msra.mxu0 0.0
        %723 = vmatprep.subr.mxu0 0.0
        %724 = vmatpush2.msra.mxu0 0.0
        %725 = vmatprep.subr.mxu0 0.0
        %726 = vmatpush2.msra.mxu0 0.0
        %727 = vmatprep.subr.mxu0 0.0
        %728 = vmatpush2.msra.mxu0 0.0
        %729 = vmatprep.subr.mxu0 0.0
        %730 = vmatpush2.msra.mxu0 0.0
        %731 = vmatprep.subr.mxu0 0.0
        %732 = vmatpush2.msra.mxu0 0.0
        %733 = vmatprep.subr.mxu0 0.0
        %734 = vmatpush2.msra.mxu0 0.0
        %735 = vmatprep.subr.mxu0 0.0
        %736 = vmatpush2.msra.mxu0 0.0
        %737 = vmatprep.subr.mxu0 0.0
        %738 = vmatpush2.msra.mxu0 0.0
        %739 = vmatprep.subr.mxu0 0.0
        %740 = vmatpush2.msra.mxu0 0.0
        %741 = vmatprep.mubr.f32.mxu0 0.0
        %742 = vmatmul.mubr.f32.gmra.mxu0 %v660
        %v743 = vpop.f32.mrf.mxu0
        %v744 = vadd.f32 0.0, %v743
        %v745 = vpop.f32.mrf.mxu0
        %746 = vdwg.mxu0
        %p747 = scmp.eq.s32.totalorder %s27, 0
        // Predicated region
        $region49: #{feed_forward.1} parent=39 // pred_check
          %p748 = pneg %p747
        $region50: #{feed_forward.1} parent=39 // pred_check_branch
          %750 = sbr.rel (%p748) target = $region52
        $region51: #{feed_forward.1} parent=39 // pred_region
          %v751 = vld [vmem:[%s4] sm:$0x1]
          %v753 = vlaneseq
          %v754 = vshrl.u32 %v753, 7
          %v755 = vsub.s32 0, %v754
          %v756 = vrot.slane %v751, %v755
          %v758 = vadd.f32 %v744, %v756
          %759 = vst [vmem:[#allocation2] sm:$0xff] %v758
        $region52: #{feed_forward.1} parent=39 // pred_fallthru
          _
        %p760 = scmp.ne.s32.totalorder %s27, 0
        // Predicated region
        $region53: #{feed_forward.1} parent=39 // pred_check
          %p761 = pneg %p760
        $region54: #{feed_forward.1} parent=39 // pred_check_branch
          %763 = sbr.rel (%p761) target = $region56
        $region55: #{feed_forward.1} parent=39 // pred_region
          %v764 = vld [vmem:[#allocation2] sm:$0xff]
          %v765 = vadd.f32 %v764, %v744
          %766 = vst [vmem:[#allocation2] sm:$0xff] %v765
        $region56: #{feed_forward.1} parent=39 // pred_fallthru
          _
        // Predicated region
        $region57: #{feed_forward.1} parent=39 // pred_check
          %p767 = pneg %p747
        $region58: #{feed_forward.1} parent=39 // pred_check_branch
          %769 = sbr.rel (%p767) target = $region60
        $region59: #{feed_forward.1} parent=39 // pred_region
          %v770 = vld [vmem:[#allocation2] sm:$0xff]
          %771 = vst [vmem:[%s565] sm:$0xff] %v770
        $region60: #{feed_forward.1} parent=39 // pred_fallthru
          _
        %p772 = scmp.lt.s32.totalorder %s26, 1
        %s773 = scalar_select %p772, %s26, 1
        %s774 = smul.addr %s773, 8
        %s775 = scalar_lea.vmem %s5, %s774
        // Predicated region
        $region61: #{feed_forward.1} parent=39 // pred_check
          %p776 = pneg %p273
        $region62: #{feed_forward.1} parent=39 // pred_check_branch
          %778 = sbr.rel (%p776) target = $region64
        $region63: #{feed_forward.1} parent=39 // pred_region
          _
        $region64: #{feed_forward.1} parent=39 // pred_fallthru
          _
      $region40: #{feed_forward.1} parent=5 // pred_fallthru
        _
      %p779 = scmp.le.s32.totalorder 2, %s17
      // Predicated region
      $region65: #{feed_forward.1} parent=5 // pred_check
        %p780 = pneg %p779
      $region66: #{feed_forward.1} parent=5 // pred_check_branch
        %782 = sbr.rel (%p780) target = $region68
      $region67: #{feed_forward.1} parent=5 // pred_region
        %s783 = ssub.s32 %s17, 2
        // Predicated region
        $region69: #{feed_forward.1} parent=67 // pred_check
          %p784 = pneg %p279
        $region70: #{feed_forward.1} parent=67 // pred_check_branch
          %786 = sbr.rel (%p784) target = $region72
        $region71: #{feed_forward.1} parent=67 // pred_region
          %p787 = scmp.lt.s32.totalorder %s28, 1
          %s788 = scalar_select %p787, %s28, 1
          %s789 = smul.addr %s788, 8
          %s790 = scalar_lea.vmem %s5, %s789
        $region72: #{feed_forward.1} parent=67 // pred_fallthru
          _
      $region68: #{feed_forward.1} parent=5 // pred_fallthru
        _
    $region6: #{feed_forward.1} parent=1 // loop_footer
      %s21 = sadd.s32 1, %s17
    $region7: #{feed_forward.1} parent=1 // loop_footer_branch
      %16 = sbr.rel target = $region3
    $region8: #{feed_forward.1} parent=1 // loop_exit
      _
    %791 = vsyncpa [#allocation4], 1
    %s792 = scalar_lea.sflag [#allocation4], 1
    %793 = vsyncpa %s792, 1
    %794 = vsyncpa [#allocation6], 1
    %s795 = scalar_lea.sflag [#allocation6], 1
    %796 = vsyncpa %s795, 1

</llo_original>
